<compile_context>
chip_gen: v5e
topology: v5e:2x2
jax: 0.10.0
libtpu: 0.0.40
codegen_flags: <defaults>
</compile_context>

<pallas_src>
import jax
import jax.numpy as jnp
from jax.experimental import pallas as pl
from jax.experimental.pallas import tpu as pltpu

LANE = 128
SUBLANE = 8


def _round_up(x, m):
    return (x + m - 1) // m * m


def _cdiv(a, b):
    return (a + b - 1) // b


def _head_kernel(x_ref, w1_ref, b1_ref, w2_ref, b2_ref, o_ref):
    # Linear1: MXU matmul in the operand dtype (bf16 fast path), f32 accumulation;
    # bias add + tanh in f32 (VALU / EUP slots, free under the MXU bottleneck).
    h = jnp.dot(x_ref[...], w1_ref[...], preferred_element_type=jnp.float32)
    h = jnp.tanh(h + b1_ref[...].astype(jnp.float32))
    # Linear2: cast activation to the weight dtype so the MXU runs at the
    # narrow-dtype rate; accumulate in f32.
    y = jnp.dot(h.astype(w2_ref.dtype), w2_ref[...],
                preferred_element_type=jnp.float32)
    y = y + b2_ref[...].astype(jnp.float32)
    # TODO(synk): training-mode dropout (stochastic masking) is not implemented;
    #             Dropout layers are identity at inference.
    o_ref[...] = y.astype(o_ref.dtype)


def _vmem_budget_and_limit():
    """Generation-aware VMEM sizing.  ~40 MiB budget / 80 MiB limit on 128 MiB
    chips (v5e/v6e); ~32 MiB / 48 MiB on 64 MiB-per-TC chips (v7x).  Falls back
    to the conservative v7x-safe numbers if hardware info is unavailable."""
    cap = 64 * 1024 * 1024
    try:
        info = pltpu.get_tpu_info()
        cap = int(getattr(info, "vmem_capacity_bytes", cap))
    except Exception:
        pass
    if cap >= 96 * 1024 * 1024:                      # v5e / v6e: 128 MiB VMEM
        return 40 * 1024 * 1024, 80 * 1024 * 1024
    return 32 * 1024 * 1024, 48 * 1024 * 1024        # v7x: 64 MiB per TensorCore


def _pick_block_rows(b8, h, l_pad, x_itemsize, out_itemsize, w_bytes, budget):
    """Largest batch tile (multiple of 8, <= 512 rows) whose double-buffered
    x/out tiles plus single-buffered resident weights fit the VMEM budget."""
    tb = min(512, b8)
    tb = max(SUBLANE, (tb // SUBLANE) * SUBLANE)
    while tb > SUBLANE:
        need = 2 * tb * (h * x_itemsize + l_pad * out_itemsize) + w_bytes
        if need <= budget:
            break
        tb = max(SUBLANE, ((tb // 2) // SUBLANE) * SUBLANE)
    return tb


def _resident_spec(shape):
    """Constant-index (VMEM-resident) block: single-buffered, since the data is
    DMA'd exactly once and a second pipeline buffer would only waste VMEM."""
    try:
        return pl.BlockSpec(shape, lambda i: (0, 0), pipeline_mode=pl.Buffered(1))
    except Exception:
        # Older jax: fall back to default (double-buffered) resident block.
        return pl.BlockSpec(shape, lambda i: (0, 0))


def wav2vec2_classification_head(features, w1, b1, w2, b2, *,
                                 prefer_bf16_matmul=True):
    """features: [B, H]  w1: [H, H]  b1: [H] or [1,H]  w2: [H, L]  b2: [L] or [1,L]
    Weights are pre-transposed vs. PyTorch nn.Linear.  Returns [B, L] in
    features.dtype.  Note: if the caller mixes dtypes (f32 features with bf16
    weights) the intermediate activation is downcast to the weight dtype."""
    B, H = features.shape
    L = w2.shape[-1]
    out_dtype = features.dtype

    b1 = b1.reshape(1, -1)
    b2 = b2.reshape(1, -1)

    # bf16 fast path: MXU runs at the narrow-dtype rate (918/996 TF/s on v6e/v7x);
    # accumulation stays f32 via preferred_element_type, bias + tanh stay f32.
    if prefer_bf16_matmul and features.dtype == jnp.float32:
        features = features.astype(jnp.bfloat16)
        w1 = w1.astype(jnp.bfloat16)
        w2 = w2.astype(jnp.bfloat16)

    # Pad the hidden (contraction / lane) dim to a multiple of 128 so matmul1
    # runs at full MXU depth with clean (8,128) layouts.  Zero padding is exact.
    H_pad = _round_up(H, LANE)
    if H_pad != H:
        features = jnp.pad(features, ((0, 0), (0, H_pad - H)))
        w1 = jnp.pad(w1, ((0, H_pad - H), (0, H_pad - H)))
        b1 = jnp.pad(b1, ((0, 0), (0, H_pad - H)))
        w2 = jnp.pad(w2, ((0, H_pad - H), (0, 0)))

    # Lane-dense output: pad labels to exactly round_up(L, 128) (unmasked
    # full-lane stores); slice back outside the pallas_call.  No extra padding.
    L_pad = _round_up(L, LANE)
    if L_pad != L:
        w2 = jnp.pad(w2, ((0, 0), (0, L_pad - L)))
        b2 = jnp.pad(b2, ((0, 0), (0, L_pad - L)))

    w_bytes = (w1.size * w1.dtype.itemsize + w2.size * w2.dtype.itemsize
               + b1.size * b1.dtype.itemsize + b2.size * b2.dtype.itemsize)

    budget, vmem_limit = _vmem_budget_and_limit()

    # Batch tiling.
    B8 = _round_up(B, SUBLANE)
    TB_max = _pick_block_rows(B8, H_pad, L_pad, features.dtype.itemsize,
                              jnp.dtype(out_dtype).itemsize, w_bytes, budget)
    # Guarantee >= 2 grid steps for medium/large batches so the "parallel" axis
    # can feed both TensorCores on v7x (neutral on single-TC v5e/v6e).
    if B8 > 64:
        TB_max = min(TB_max, _round_up(_cdiv(B8, 2), SUBLANE))
    # Balanced tiles: padding waste bounded by ~one sublane per tile rather than
    # up to a whole tile for awkward batch sizes.
    n_tiles = _cdiv(B8, TB_max)
    TB = _round_up(_cdiv(B8, n_tiles), SUBLANE)
    B_pad = n_tiles * TB
    if B_pad != B:
        features = jnp.pad(features, ((0, B_pad - B), (0, 0)))

    grid = (n_tiles,)

    cost = pl.CostEstimate(
        flops=2 * B_pad * H_pad * (H_pad + L_pad),
        transcendentals=B_pad * H_pad,
        bytes_accessed=(features.size * features.dtype.itemsize + w_bytes
                        + B_pad * L_pad * jnp.dtype(out_dtype).itemsize),
    )

    out = pl.pallas_call(
        _head_kernel,
        out_shape=jax.ShapeDtypeStruct((B_pad, L_pad), out_dtype),
        grid=grid,
        in_specs=[
            pl.BlockSpec((TB, H_pad), lambda i: (i, 0)),   # x: tiled over batch
            _resident_spec((H_pad, H_pad)),                # W1: resident, 1 buffer
            _resident_spec((1, H_pad)),                    # b1: resident
            _resident_spec((H_pad, L_pad)),                # W2 (padded): resident
            _resident_spec((1, L_pad)),                    # b2 (padded): resident
        ],
        out_specs=pl.BlockSpec((TB, L_pad), lambda i: (i, 0)),
        compiler_params=pltpu.CompilerParams(
            # Batch axis is independent -> pipelined, shardable across the two
            # TensorCores on v7x (neutral on v5e/v6e).
            dimension_semantics=("parallel",),
            vmem_limit_bytes=vmem_limit,
        ),
        cost_estimate=cost,
    )(features, w1, b1, w2, b2)

    return out[:B, :L]


def reference_head(features, w1, b1, w2, b2):
    x = features.astype(jnp.float32)
    h = jnp.tanh(x @ w1.astype(jnp.float32) + b1.reshape(1, -1).astype(jnp.float32))
    y = h @ w2.astype(jnp.float32) + b2.reshape(1, -1).astype(jnp.float32)
    return y.astype(features.dtype)


if __name__ == "__main__":
    # Small config consistent with the module: hidden_size=32, num_labels=8, batch=8.
    batch, hidden, num_labels = 8, 32, 8

    key = jax.random.PRNGKey(0)
    kx, k1, kb1, k2, kb2 = jax.random.split(key, 5)

    bound1 = 1.0 / jnp.sqrt(hidden)
    x = jax.random.normal(kx, (batch, hidden), dtype=jnp.float32)
    w1 = jax.random.uniform(k1, (hidden, hidden), jnp.float32, -bound1, bound1)
    b1 = jax.random.uniform(kb1, (1, hidden), jnp.float32, -bound1, bound1)
    w2 = jax.random.uniform(k2, (hidden, num_labels), jnp.float32, -bound1, bound1)
    b2 = jax.random.uniform(kb2, (1, num_labels), jnp.float32, -bound1, bound1)

    ref = reference_head(x, w1, b1, w2, b2)

    # 1) Strict f32 path (no bf16 cast): exact check against the reference.
    out_f32 = wav2vec2_classification_head(x, w1, b1, w2, b2,
                                           prefer_bf16_matmul=False)
    jax.block_until_ready(out_f32)
    assert out_f32.shape == (batch, num_labels)
    assert jnp.allclose(out_f32, ref, atol=1e-5, rtol=1e-5), "f32 mismatch vs reference"

    # 2) Default path (bf16 matmul fast path, f32 accumulation): loose tolerance.
    out_fast = wav2vec2_classification_head(x, w1, b1, w2, b2)
    jax.block_until_ready(out_fast)
    assert out_fast.shape == (batch, num_labels)
    assert out_fast.dtype == jnp.float32
    assert jnp.allclose(out_fast, ref, atol=5e-2, rtol=5e-2), "bf16-fast-path mismatch"

    # 3) All-bf16 caller (narrow-dtype end to end): loose tolerance.
    xb, w1b, b1b, w2b, b2b = (a.astype(jnp.bfloat16) for a in (x, w1, b1, w2, b2))
    out_bf16 = wav2vec2_classification_head(xb, w1b, b1b, w2b, b2b)
    jax.block_until_ready(out_bf16)
    ref_bf16 = reference_head(xb, w1b, b1b, w2b, b2b)
    assert out_bf16.shape == (batch, num_labels)
    assert jnp.allclose(out_bf16.astype(jnp.float32), ref_bf16.astype(jnp.float32),
                        atol=5e-2, rtol=5e-2), "bf16 mismatch vs reference"

    # 4) Awkward batch size (exercises sublane padding + balanced-tile path).
    x_odd = jax.random.normal(kx, (20, hidden), dtype=jnp.float32)
    out_odd = wav2vec2_classification_head(x_odd, w1, b1, w2, b2,
                                           prefer_bf16_matmul=False)
    jax.block_until_ready(out_odd)
    ref_odd = reference_head(x_odd, w1, b1, w2, b2)
    assert out_odd.shape == (20, num_labels)
    assert jnp.allclose(out_odd, ref_odd, atol=1e-5, rtol=1e-5), "odd-batch mismatch"

    print("KERNEL_OK")
</pallas_src>

<mosaic_0001>
module attributes {stable_mosaic.version = 11 : i64} {
  func.func @_head_kernel(%arg0: i32, %arg1: memref<8x128xf32, #tpu.memory_space<vmem>>, %arg2: memref<128x128xf32, #tpu.memory_space<vmem>>, %arg3: memref<1x128xf32, #tpu.memory_space<vmem>>, %arg4: memref<128x128xf32, #tpu.memory_space<vmem>>, %arg5: memref<1x128xf32, #tpu.memory_space<vmem>>, %arg6: memref<8x128xf32, #tpu.memory_space<vmem>>) attributes {dimension_semantics = [#tpu.dimension_semantics<parallel>], iteration_bounds = array<i64: 1>, scalar_prefetch = 0 : i64, scratch_operands = 0 : i64, tpu.core_type = #tpu.core_type<tc>, window_params = [{transform_indices = @transform_0, window_bounds = array<i64: 8, 128>}, {pipeline_mode = #tpu.pipeline_mode<synchronous>, transform_indices = @transform_1, window_bounds = array<i64: 128, 128>}, {pipeline_mode = #tpu.pipeline_mode<synchronous>, transform_indices = @transform_2, window_bounds = array<i64: 1, 128>}, {pipeline_mode = #tpu.pipeline_mode<synchronous>, transform_indices = @transform_3, window_bounds = array<i64: 128, 128>}, {pipeline_mode = #tpu.pipeline_mode<synchronous>, transform_indices = @transform_4, window_bounds = array<i64: 1, 128>}, {transform_indices = @transform_5, window_bounds = array<i64: 8, 128>}]} {
    %c0 = arith.constant 0 : index
    %c0_0 = arith.constant 0 : index
    %0 = vector.load %arg1[%c0, %c0_0] : memref<8x128xf32, #tpu.memory_space<vmem>>, vector<8x128xf32>
    %c0_1 = arith.constant 0 : index
    %c0_2 = arith.constant 0 : index
    %1 = vector.load %arg2[%c0_1, %c0_2] : memref<128x128xf32, #tpu.memory_space<vmem>>, vector<128x128xf32>
    %cst = arith.constant dense<0.000000e+00> : vector<8x128xf32>
    %2 = tpu.matmul %0, %1, %cst {dimension_numbers = #tpu.dot_dimension_numbers<[1], [0], [0], [1], [0, 0, 1, 1], [], []>} : vector<8x128xf32>, vector<128x128xf32>, vector<8x128xf32> -> vector<8x128xf32>
    %c0_3 = arith.constant 0 : index
    %c0_4 = arith.constant 0 : index
    %3 = vector.load %arg3[%c0_3, %c0_4] : memref<1x128xf32, #tpu.memory_space<vmem>>, vector<1x128xf32>
    %4 = vector.broadcast %3 : vector<1x128xf32> to vector<8x128xf32>
    %5 = arith.addf %2, %4 : vector<8x128xf32>
    %6 = math.tanh %5 : vector<8x128xf32>
    %c0_5 = arith.constant 0 : index
    %c0_6 = arith.constant 0 : index
    %7 = vector.load %arg4[%c0_5, %c0_6] : memref<128x128xf32, #tpu.memory_space<vmem>>, vector<128x128xf32>
    %cst_7 = arith.constant dense<0.000000e+00> : vector<8x128xf32>
    %8 = tpu.matmul %6, %7, %cst_7 {dimension_numbers = #tpu.dot_dimension_numbers<[1], [0], [0], [1], [0, 0, 1, 1], [], []>} : vector<8x128xf32>, vector<128x128xf32>, vector<8x128xf32> -> vector<8x128xf32>
    %c0_8 = arith.constant 0 : index
    %c0_9 = arith.constant 0 : index
    %9 = vector.load %arg5[%c0_8, %c0_9] : memref<1x128xf32, #tpu.memory_space<vmem>>, vector<1x128xf32>
    %10 = vector.broadcast %9 : vector<1x128xf32> to vector<8x128xf32>
    %11 = arith.addf %8, %10 : vector<8x128xf32>
    %c0_10 = arith.constant 0 : index
    %c0_11 = arith.constant 0 : index
    %12 = vector.load %arg6[%c0_10, %c0_11] : memref<8x128xf32, #tpu.memory_space<vmem>>, vector<8x128xf32>
    tpu.vector_store %arg6[%c0_10, %c0_11], %11 {strides = array<i32>} : memref<8x128xf32, #tpu.memory_space<vmem>>, vector<8x128xf32>,
    return
  }
  func.func @transform_0(%arg0: i32) -> (i32, i32) {
    %c0_i32 = arith.constant 0 : i32
    %c0_i32_0 = arith.constant 0 : i32
    return %arg0, %c0_i32 : i32, i32
  }
  func.func @transform_1(%arg0: i32) -> (i32, i32) {
    %c0_i32 = arith.constant 0 : i32
    %c0_i32_0 = arith.constant 0 : i32
    %c0_i32_1 = arith.constant 0 : i32
    return %c0_i32, %c0_i32_0 : i32, i32
  }
  func.func @transform_2(%arg0: i32) -> (i32, i32) {
    %c0_i32 = arith.constant 0 : i32
    %c0_i32_0 = arith.constant 0 : i32
    %c0_i32_1 = arith.constant 0 : i32
    return %c0_i32, %c0_i32_0 : i32, i32
  }
  func.func @transform_3(%arg0: i32) -> (i32, i32) {
    %c0_i32 = arith.constant 0 : i32
    %c0_i32_0 = arith.constant 0 : i32
    %c0_i32_1 = arith.constant 0 : i32
    return %c0_i32, %c0_i32_0 : i32, i32
  }
  func.func @transform_4(%arg0: i32) -> (i32, i32) {
    %c0_i32 = arith.constant 0 : i32
    %c0_i32_0 = arith.constant 0 : i32
    %c0_i32_1 = arith.constant 0 : i32
    return %c0_i32, %c0_i32_0 : i32, i32
  }
  func.func @transform_5(%arg0: i32) -> (i32, i32) {
    %c0_i32 = arith.constant 0 : i32
    %c0_i32_0 = arith.constant 0 : i32
    return %arg0, %c0_i32 : i32, i32
  }
}

</mosaic_0001>

<llo_original>
// kernel: tpu_custom_call.1
$region0: #{tpu_custom_call.1}
  #allocation0 [shape = 'u32[]', space=smem, size = 0x4, offset = 0x4, fixed_abs, tag = 'smem constant byte address 0x4 - core index']
  #allocation1 [shape = 'u32[72,128]{1,0:T(1,128)}', space=vmem, size = 0x9000, scoped, tag = 'internal scratch']
  %s0 = inlined_call_operand.hbm [shape: f32[8,128], index: 0, kind: input, shape index: {}]
  %s1 = inlined_call_operand.hbm [shape: f32[128,128], index: 1, kind: input, shape index: {}]
  %s2 = inlined_call_operand.vmem [shape: f32[1,128], index: 2, kind: input, shape index: {}]
  %s3 = inlined_call_operand.hbm [shape: f32[128,128], index: 3, kind: input, shape index: {}]
  %s4 = inlined_call_operand.vmem [shape: f32[1,128], index: 4, kind: input, shape index: {}]
  %s5 = inlined_call_operand.hbm [shape: f32[8,128], index: 5, kind: output, shape index: {}]
  %s6 = sld [smem:[#allocation0]]
  $region42: #{tpu_custom_call.1} parent=0
    _
  %s8 = ssub.s32 1, %s6
  %s9 = scalar_select 0, %s8, %s6
  $region1: #{tpu_custom_call.1} parent=0
    #allocation2 [shape = 'u8[4096]{0}', space=vmem, size = 0x1000, scoped, tag = 'input window, operand 0, single buffered']
    #allocation3 [shape = 's32[1]{0}', space=sflag, size = 0x4, scoped, tag = 'scoped memory for tpu_custom_call.1']
    #allocation4 [shape = 's32[1]{0}', space=sflag, size = 0x4, scoped, tag = 'scoped memory for tpu_custom_call.1']
    #allocation5 [shape = 'u8[65536]{0}', space=vmem, size = 0x10000, scoped, tag = 'input window, operand 1, single buffered']
    #allocation6 [shape = 's32[1]{0}', space=sflag, size = 0x4, scoped, tag = 'scoped memory for tpu_custom_call.1']
    #allocation7 [shape = 'u8[65536]{0}', space=vmem, size = 0x10000, scoped, tag = 'input window, operand 3, single buffered']
    #allocation8 [shape = 'u8[4096]{0}', space=vmem, size = 0x1000, scoped, tag = 'output window, operand 0, single buffered']
    %10 = vsyncpa [#allocation3], 0
    %11 = vsyncpa [#allocation6], 0
    %12 = vsyncpa [#allocation4], 0
    // Predicated region
    $region2: #{tpu_custom_call.1} parent=1 // pred_check
      _
    $region3: #{tpu_custom_call.1} parent=1 // pred_check_branch
      %14 = sbr.rel (0) target = $region5
    $region4: #{tpu_custom_call.1} parent=1 // pred_region
      %16 = vsyncadd [#allocation3], 0
      %s18 = sshll.u32 %s0, 4
      %s19 = int_to_ptr.hbm [resolvable:$true] %s18
      %s20 = sshll.u32 [#allocation2], 4
      %s21 = int_to_ptr.vmem [resolvable:$true] %s20
      %23 = dma.hbm_to_vmem [thread:$0]  %s19, 128, %s21, [#allocation3]
    $region5: #{tpu_custom_call.1} parent=1 // pred_fallthru
      _
    // Predicated region
    $region6: #{tpu_custom_call.1} parent=1 // pred_check
      _
    $region7: #{tpu_custom_call.1} parent=1 // pred_check_branch
      %25 = sbr.rel (0) target = $region9
    $region8: #{tpu_custom_call.1} parent=1 // pred_region
      %27 = vsyncadd [#allocation6], 0
      %s28 = sshll.u32 %s1, 4
      %s29 = int_to_ptr.hbm [resolvable:$true] %s28
      %s30 = sshll.u32 [#allocation5], 4
      %s31 = int_to_ptr.vmem [resolvable:$true] %s30
      %36 = dma.hbm_to_vmem [thread:$0]  %s29, 2048, %s31, [#allocation6], 128, 128, 8
    $region9: #{tpu_custom_call.1} parent=1 // pred_fallthru
      _
    // Predicated region
    $region10: #{tpu_custom_call.1} parent=1 // pred_check
      _
    $region11: #{tpu_custom_call.1} parent=1 // pred_check_branch
      %38 = sbr.rel (0) target = $region13
    $region12: #{tpu_custom_call.1} parent=1 // pred_region
      _
    $region13: #{tpu_custom_call.1} parent=1 // pred_fallthru
      _
    // Predicated region
    $region14: #{tpu_custom_call.1} parent=1 // pred_check
      _
    $region15: #{tpu_custom_call.1} parent=1 // pred_check_branch
      %40 = sbr.rel (0) target = $region17
    $region16: #{tpu_custom_call.1} parent=1 // pred_region
      %42 = vsyncadd [#allocation6], 0
      %s43 = sshll.u32 %s3, 4
      %s44 = int_to_ptr.hbm [resolvable:$true] %s43
      %s45 = sshll.u32 [#allocation7], 4
      %s46 = int_to_ptr.vmem [resolvable:$true] %s45
      %51 = dma.hbm_to_vmem [thread:$0]  %s44, 2048, %s46, [#allocation6], 128, 128, 8
    $region17: #{tpu_custom_call.1} parent=1 // pred_fallthru
      _
    // Predicated region
    $region18: #{tpu_custom_call.1} parent=1 // pred_check
      _
    $region19: #{tpu_custom_call.1} parent=1 // pred_check_branch
      %53 = sbr.rel (0) target = $region21
    $region20: #{tpu_custom_call.1} parent=1 // pred_region
      _
    $region21: #{tpu_custom_call.1} parent=1 // pred_fallthru
      _
    // Predicated region
    $region22: #{tpu_custom_call.1} parent=1 // pred_check
      _
    $region23: #{tpu_custom_call.1} parent=1 // pred_check_branch
      %55 = sbr.rel (0) target = $region25
    $region24: #{tpu_custom_call.1} parent=1 // pred_region
      %57 = dma.done [#allocation3], 128
    $region25: #{tpu_custom_call.1} parent=1 // pred_fallthru
      _
    // Predicated region
    $region26: #{tpu_custom_call.1} parent=1 // pred_check
      _
    $region27: #{tpu_custom_call.1} parent=1 // pred_check_branch
      %59 = sbr.rel (0) target = $region29
    $region28: #{tpu_custom_call.1} parent=1 // pred_region
      %61 = dma.done [#allocation6], 2048
    $region29: #{tpu_custom_call.1} parent=1 // pred_fallthru
      _
    // Predicated region
    $region30: #{tpu_custom_call.1} parent=1 // pred_check
      _
    $region31: #{tpu_custom_call.1} parent=1 // pred_check_branch
      %63 = sbr.rel (0) target = $region33
    $region32: #{tpu_custom_call.1} parent=1 // pred_region
      %65 = dma.done [#allocation6], 2048
    $region33: #{tpu_custom_call.1} parent=1 // pred_fallthru
      _
    %v66 = vld [vmem:[#allocation2] sm:$0xff]
    %v67 = vld [vmem:[#allocation5] sm:$0xff]
    %v68 = vld [vmem:[#allocation5 + $0x8] sm:$0xff]
    %v69 = vld [vmem:[#allocation5 + $0x10] sm:$0xff]
    %v70 = vld [vmem:[#allocation5 + $0x18] sm:$0xff]
    %v71 = vld [vmem:[#allocation5 + $0x20] sm:$0xff]
    %v72 = vld [vmem:[#allocation5 + $0x28] sm:$0xff]
    %v73 = vld [vmem:[#allocation5 + $0x30] sm:$0xff]
    %v74 = vld [vmem:[#allocation5 + $0x38] sm:$0xff]
    %v75 = vld [vmem:[#allocation5 + $0x40] sm:$0xff]
    %v76 = vld [vmem:[#allocation5 + $0x48] sm:$0xff]
    %v77 = vld [vmem:[#allocation5 + $0x50] sm:$0xff]
    %v78 = vld [vmem:[#allocation5 + $0x58] sm:$0xff]
    %v79 = vld [vmem:[#allocation5 + $0x60] sm:$0xff]
    %v80 = vld [vmem:[#allocation5 + $0x68] sm:$0xff]
    %v81 = vld [vmem:[#allocation5 + $0x70] sm:$0xff]
    %v82 = vld [vmem:[#allocation5 + $0x78] sm:$0xff]
    %v83 = vld [vmem:[%s2] sm:$0x1]
    %v85 = vperm.slane %v83, 0
    %87 = vmatpush.msra.mxu0 %v82
    %88 = vmatpush.msra.mxu0 %v81
    %89 = vmatpush.msra.mxu0 %v80
    %90 = vmatpush.msra.mxu0 %v79
    %91 = vmatpush.msra.mxu0 %v78
    %92 = vmatpush.msra.mxu0 %v77
    %93 = vmatpush.msra.mxu0 %v76
    %94 = vmatpush.msra.mxu0 %v75
    %95 = vmatpush.msra.mxu0 %v74
    %96 = vmatpush.msra.mxu0 %v73
    %97 = vmatpush.msra.mxu0 %v72
    %98 = vmatpush.msra.mxu0 %v71
    %99 = vmatpush.msra.mxu0 %v70
    %100 = vmatpush.msra.mxu0 %v69
    %101 = vmatpush.msra.mxu0 %v68
    %102 = vmatpush.msra.mxu0 %v67
    %103 = vmatmul.f32.gmra.mxu0 %v66
    %v104 = vpop.f32.mrf.mxu0
    %v105 = vadd.f32 %v85, %v104
    %106 = vdwg.mxu0
    %v107 = vtanh.pop %v105
    %v108 = vld [vmem:[#allocation7] sm:$0xff]
    %v109 = vld [vmem:[#allocation7 + $0x8] sm:$0xff]
    %v110 = vld [vmem:[#allocation7 + $0x10] sm:$0xff]
    %v111 = vld [vmem:[#allocation7 + $0x18] sm:$0xff]
    %v112 = vld [vmem:[#allocation7 + $0x20] sm:$0xff]
    %v113 = vld [vmem:[#allocation7 + $0x28] sm:$0xff]
    %v114 = vld [vmem:[#allocation7 + $0x30] sm:$0xff]
    %v115 = vld [vmem:[#allocation7 + $0x38] sm:$0xff]
    %v116 = vld [vmem:[#allocation7 + $0x40] sm:$0xff]
    %v117 = vld [vmem:[#allocation7 + $0x48] sm:$0xff]
    %v118 = vld [vmem:[#allocation7 + $0x50] sm:$0xff]
    %v119 = vld [vmem:[#allocation7 + $0x58] sm:$0xff]
    %v120 = vld [vmem:[#allocation7 + $0x60] sm:$0xff]
    %v121 = vld [vmem:[#allocation7 + $0x68] sm:$0xff]
    %v122 = vld [vmem:[#allocation7 + $0x70] sm:$0xff]
    %v123 = vld [vmem:[#allocation7 + $0x78] sm:$0xff]
    %v124 = vld [vmem:[%s4] sm:$0x1]
    %v126 = vperm.slane %v124, 0
    %128 = vmatpush.msra.mxu0 %v123
    %129 = vmatpush.msra.mxu0 %v122
    %130 = vmatpush.msra.mxu0 %v121
    %131 = vmatpush.msra.mxu0 %v120
    %132 = vmatpush.msra.mxu0 %v119
    %133 = vmatpush.msra.mxu0 %v118
    %134 = vmatpush.msra.mxu0 %v117
    %135 = vmatpush.msra.mxu0 %v116
    %136 = vmatpush.msra.mxu0 %v115
    %137 = vmatpush.msra.mxu0 %v114
    %138 = vmatpush.msra.mxu0 %v113
    %139 = vmatpush.msra.mxu0 %v112
    %140 = vmatpush.msra.mxu0 %v111
    %141 = vmatpush.msra.mxu0 %v110
    %142 = vmatpush.msra.mxu0 %v109
    %143 = vmatpush.msra.mxu0 %v108
    %144 = vmatmul.f32.gmra.mxu0 %v107
    %v145 = vpop.f32.mrf.mxu0
    %v146 = vadd.f32 %v126, %v145
    %147 = vdwg.mxu0
    %148 = vst [vmem:[#allocation8] sm:$0xff] %v146
    // Predicated region
    $region34: #{tpu_custom_call.1} parent=1 // pred_check
      _
    $region35: #{tpu_custom_call.1} parent=1 // pred_check_branch
      %150 = sbr.rel (0) target = $region37
    $region36: #{tpu_custom_call.1} parent=1 // pred_region
      %152 = vsyncadd [#allocation4], 0
      %s154 = sshll.u32 [#allocation8], 4
      %s155 = int_to_ptr.vmem [resolvable:$true] %s154
      %s156 = sshll.u32 %s5, 4
      %s157 = int_to_ptr.hbm [resolvable:$true] %s156
      %159 = dma.vmem_to_hbm [thread:$0]  %s155, 128, %s157, [#allocation4]
    $region37: #{tpu_custom_call.1} parent=1 // pred_fallthru
      _
    // Predicated region
    $region38: #{tpu_custom_call.1} parent=1 // pred_check
      _
    $region39: #{tpu_custom_call.1} parent=1 // pred_check_branch
      %161 = sbr.rel (0) target = $region41
    $region40: #{tpu_custom_call.1} parent=1 // pred_region
      %163 = dma.done [#allocation4], 128
    $region41: #{tpu_custom_call.1} parent=1 // pred_fallthru
      _
    %164 = vsyncpa [#allocation3], 1
    %165 = vsyncpa [#allocation6], 1
    %166 = vsyncpa [#allocation4], 1

</llo_original>
